<compile_context>
chip_gen: v5e
topology: v5e:2x2
jax: 0.10.0
libtpu: 0.0.40
codegen_flags: <defaults>
</compile_context>

<pallas_src>
import jax
import jax.numpy as jnp
from jax.experimental import pallas as pl
from jax.experimental.pallas import tpu as pltpu

# Layer dims of SimpleNet_mnist
D_IN, D1, D2, D3, D4, D_OUT = 28 * 28, 64, 128, 256, 64, 10
OUT_PAD = 128  # lane-dense padded logits width


def _mlp_kernel(x_ref, w1_ref, w2_ref, w3_ref, w4_ref, w5_ref, o_ref):
    # Five fused matmuls; bf16 operands, f32 accumulation on the MXU.
    h = jnp.dot(x_ref[...], w1_ref[...], preferred_element_type=jnp.float32)
    h = jnp.maximum(h, 0.0).astype(jnp.bfloat16)
    h = jnp.dot(h, w2_ref[...], preferred_element_type=jnp.float32)
    h = jnp.maximum(h, 0.0).astype(jnp.bfloat16)
    h = jnp.dot(h, w3_ref[...], preferred_element_type=jnp.float32)
    h = jnp.maximum(h, 0.0).astype(jnp.bfloat16)
    h = jnp.dot(h, w4_ref[...], preferred_element_type=jnp.float32)
    h = jnp.maximum(h, 0.0).astype(jnp.bfloat16)
    # w5 is zero-padded to 128 lanes -> full-width, unmasked store.
    o_ref[...] = jnp.dot(h, w5_ref[...],
                         preferred_element_type=jnp.float32).astype(o_ref.dtype)


def simplenet_mnist_forward(x, weights, *, tb=1024):
    """x: (B, 1, 28, 28) or (B, 784).  weights: dict w1..w5, each (in, out) f32.
    Returns logits (B, 10) in float32."""
    x2d = x.reshape(-1, D_IN).astype(jnp.bfloat16)
    B = x2d.shape[0]

    # Effective tile: multiple of 8, no larger than the (rounded-up) batch.
    tb_eff = min(tb, max(8, ((B + 7) // 8) * 8))
    Bp = pl.cdiv(B, tb_eff) * tb_eff
    if Bp != B:
        # Only triggers on ragged batches; pad in bf16 (half the bytes).
        x2d = jnp.pad(x2d, ((0, Bp - B), (0, 0)))

    # bf16 weights; pad the last layer's output dim 10 -> 128 (lane-dense).
    w1 = weights["w1"].astype(jnp.bfloat16)
    w2 = weights["w2"].astype(jnp.bfloat16)
    w3 = weights["w3"].astype(jnp.bfloat16)
    w4 = weights["w4"].astype(jnp.bfloat16)
    w5 = jnp.pad(weights["w5"].astype(jnp.bfloat16),
                 ((0, 0), (0, OUT_PAD - D_OUT)))

    def w_spec(w):
        # Full-array block, constant index map -> resident across grid steps.
        return pl.BlockSpec(w.shape, lambda i: (0, 0))

    flops_per_row = 2 * (D_IN * D1 + D1 * D2 + D2 * D3 + D3 * D4 + D4 * OUT_PAD)
    w_bytes = 2 * (D_IN * D1 + D1 * D2 + D2 * D3 + D3 * D4 + D4 * OUT_PAD)
    cost = pl.CostEstimate(
        flops=Bp * flops_per_row,
        transcendentals=0,
        bytes_accessed=Bp * D_IN * 2 + w_bytes + Bp * OUT_PAD * 4,
    )

    out = pl.pallas_call(
        _mlp_kernel,
        out_shape=jax.ShapeDtypeStruct((Bp, OUT_PAD), jnp.float32),
        grid_spec=pltpu.PrefetchScalarGridSpec(
            num_scalar_prefetch=0,
            grid=(Bp // tb_eff,),
            in_specs=[
                pl.BlockSpec((tb_eff, D_IN), lambda i: (i, 0)),
                w_spec(w1), w_spec(w2), w_spec(w3), w_spec(w4), w_spec(w5),
            ],
            out_specs=pl.BlockSpec((tb_eff, OUT_PAD), lambda i: (i, 0)),
        ),
        compiler_params=pltpu.CompilerParams(
            dimension_semantics=("parallel",),
            vmem_limit_bytes=48 * 1024 * 1024,
        ),
        cost_estimate=cost,
    )(x2d, w1, w2, w3, w4, w5)

    return out[:B, :D_OUT]


def init_weights(key):
    """Deterministic synthetic weights, stored pre-transposed as (in, out), f32."""
    dims = [(D_IN, D1), (D1, D2), (D2, D3), (D3, D4), (D4, D_OUT)]
    keys = jax.random.split(key, len(dims))
    weights = {}
    for n, ((d_in, d_out), k) in enumerate(zip(dims, keys), start=1):
        # PyTorch default Linear init: U(-1/sqrt(in), 1/sqrt(in)) on (out, in);
        # generated directly in the transposed (in, out) layout.
        bound = 1.0 / (d_in ** 0.5)
        weights[f"w{n}"] = jax.random.uniform(
            k, (d_in, d_out), jnp.float32, minval=-bound, maxval=bound)
    return weights


def reference_forward_f32(x, weights):
    """Pure-f32 reference of the original PyTorch module."""
    h = x.reshape(-1, D_IN).astype(jnp.float32)
    h = jnp.maximum(h @ weights["w1"], 0.0)
    h = jnp.maximum(h @ weights["w2"], 0.0)
    h = jnp.maximum(h @ weights["w3"], 0.0)
    h = jnp.maximum(h @ weights["w4"], 0.0)
    return h @ weights["w5"]


def reference_forward_bf16(x, weights):
    """Reference mirroring the kernel's precision (bf16 operands, f32 accum)."""
    def bf(a):
        return a.astype(jnp.bfloat16).astype(jnp.float32)
    h = bf(x.reshape(-1, D_IN))
    h = bf(jnp.maximum(h @ bf(weights["w1"]), 0.0))
    h = bf(jnp.maximum(h @ bf(weights["w2"]), 0.0))
    h = bf(jnp.maximum(h @ bf(weights["w3"]), 0.0))
    h = bf(jnp.maximum(h @ bf(weights["w4"]), 0.0))
    return h @ bf(weights["w5"])


if __name__ == "__main__":
    key = jax.random.PRNGKey(0)
    kx, kw = jax.random.split(key)
    # Small MNIST-like batch, NCHW as the PyTorch module expects.
    x = jax.random.normal(kx, (8, 1, 28, 28), jnp.float32)
    weights = init_weights(kw)

    out = simplenet_mnist_forward(x, weights)
    out = jax.block_until_ready(out)
    assert out.shape == (8, D_OUT), out.shape

    # Tight check against a reference with matching (bf16 -> f32-accum) math.
    ref_bf16 = reference_forward_bf16(x, weights)
    assert jnp.allclose(out, ref_bf16, atol=2e-3, rtol=2e-3), \
        float(jnp.max(jnp.abs(out - ref_bf16)))

    # Loose sanity check against the pure-f32 PyTorch-equivalent forward.
    ref_f32 = reference_forward_f32(x, weights)
    assert jnp.allclose(out, ref_f32, atol=2e-2, rtol=2e-2), \
        float(jnp.max(jnp.abs(out - ref_f32)))

    print("KERNEL_OK")
</pallas_src>

<mosaic_0001>
module attributes {stable_mosaic.version = 11 : i64} {
  func.func @_mlp_kernel(%arg0: i32, %arg1: memref<8x784xbf16, #tpu.memory_space<vmem>>, %arg2: memref<784x64xbf16, #tpu.memory_space<vmem>>, %arg3: memref<64x128xbf16, #tpu.memory_space<vmem>>, %arg4: memref<128x256xbf16, #tpu.memory_space<vmem>>, %arg5: memref<256x64xbf16, #tpu.memory_space<vmem>>, %arg6: memref<64x128xbf16, #tpu.memory_space<vmem>>, %arg7: memref<8x128xf32, #tpu.memory_space<vmem>>) attributes {dimension_semantics = [#tpu.dimension_semantics<parallel>], iteration_bounds = array<i64: 1>, scalar_prefetch = 0 : i64, scratch_operands = 0 : i64, tpu.core_type = #tpu.core_type<tc>, window_params = [{transform_indices = @transform_0, window_bounds = array<i64: 8, 784>}, {pipeline_mode = #tpu.pipeline_mode<synchronous>, transform_indices = @transform_1, window_bounds = array<i64: 784, 64>}, {pipeline_mode = #tpu.pipeline_mode<synchronous>, transform_indices = @transform_2, window_bounds = array<i64: 64, 128>}, {pipeline_mode = #tpu.pipeline_mode<synchronous>, transform_indices = @transform_3, window_bounds = array<i64: 128, 256>}, {pipeline_mode = #tpu.pipeline_mode<synchronous>, transform_indices = @transform_4, window_bounds = array<i64: 256, 64>}, {pipeline_mode = #tpu.pipeline_mode<synchronous>, transform_indices = @transform_5, window_bounds = array<i64: 64, 128>}, {transform_indices = @transform_6, window_bounds = array<i64: 8, 128>}]} {
    %c0 = arith.constant 0 : index
    %c0_0 = arith.constant 0 : index
    %0 = vector.load %arg1[%c0, %c0_0] : memref<8x784xbf16, #tpu.memory_space<vmem>>, vector<8x784xbf16>
    %c0_1 = arith.constant 0 : index
    %c0_2 = arith.constant 0 : index
    %1 = vector.load %arg2[%c0_1, %c0_2] : memref<784x64xbf16, #tpu.memory_space<vmem>>, vector<784x64xbf16>
    %cst = arith.constant dense<0.000000e+00> : vector<8x64xf32>
    %2 = tpu.matmul %0, %1, %cst {dimension_numbers = #tpu.dot_dimension_numbers<[1], [0], [0], [1], [0, 0, 1, 1], [], []>} : vector<8x784xbf16>, vector<784x64xbf16>, vector<8x64xf32> -> vector<8x64xf32>
    %cst_3 = arith.constant 0.000000e+00 : f32
    %3 = vector.broadcast %cst_3 : f32 to vector<8x64xf32>
    %4 = arith.maximumf %2, %3 : vector<8x64xf32>
    %5 = arith.truncf %4 : vector<8x64xf32> to vector<8x64xbf16>
    %c0_4 = arith.constant 0 : index
    %c0_5 = arith.constant 0 : index
    %6 = vector.load %arg3[%c0_4, %c0_5] : memref<64x128xbf16, #tpu.memory_space<vmem>>, vector<64x128xbf16>
    %cst_6 = arith.constant dense<0.000000e+00> : vector<8x128xf32>
    %7 = tpu.matmul %5, %6, %cst_6 {dimension_numbers = #tpu.dot_dimension_numbers<[1], [0], [0], [1], [0, 0, 1, 1], [], []>} : vector<8x64xbf16>, vector<64x128xbf16>, vector<8x128xf32> -> vector<8x128xf32>
    %cst_7 = arith.constant 0.000000e+00 : f32
    %8 = vector.broadcast %cst_7 : f32 to vector<8x128xf32>
    %9 = arith.maximumf %7, %8 : vector<8x128xf32>
    %10 = arith.truncf %9 : vector<8x128xf32> to vector<8x128xbf16>
    %c0_8 = arith.constant 0 : index
    %c0_9 = arith.constant 0 : index
    %11 = vector.load %arg4[%c0_8, %c0_9] : memref<128x256xbf16, #tpu.memory_space<vmem>>, vector<128x256xbf16>
    %cst_10 = arith.constant dense<0.000000e+00> : vector<8x256xf32>
    %12 = tpu.matmul %10, %11, %cst_10 {dimension_numbers = #tpu.dot_dimension_numbers<[1], [0], [0], [1], [0, 0, 1, 1], [], []>} : vector<8x128xbf16>, vector<128x256xbf16>, vector<8x256xf32> -> vector<8x256xf32>
    %cst_11 = arith.constant 0.000000e+00 : f32
    %13 = vector.broadcast %cst_11 : f32 to vector<8x256xf32>
    %14 = arith.maximumf %12, %13 : vector<8x256xf32>
    %15 = arith.truncf %14 : vector<8x256xf32> to vector<8x256xbf16>
    %c0_12 = arith.constant 0 : index
    %c0_13 = arith.constant 0 : index
    %16 = vector.load %arg5[%c0_12, %c0_13] : memref<256x64xbf16, #tpu.memory_space<vmem>>, vector<256x64xbf16>
    %cst_14 = arith.constant dense<0.000000e+00> : vector<8x64xf32>
    %17 = tpu.matmul %15, %16, %cst_14 {dimension_numbers = #tpu.dot_dimension_numbers<[1], [0], [0], [1], [0, 0, 1, 1], [], []>} : vector<8x256xbf16>, vector<256x64xbf16>, vector<8x64xf32> -> vector<8x64xf32>
    %cst_15 = arith.constant 0.000000e+00 : f32
    %18 = vector.broadcast %cst_15 : f32 to vector<8x64xf32>
    %19 = arith.maximumf %17, %18 : vector<8x64xf32>
    %20 = arith.truncf %19 : vector<8x64xf32> to vector<8x64xbf16>
    %c0_16 = arith.constant 0 : index
    %c0_17 = arith.constant 0 : index
    %21 = vector.load %arg6[%c0_16, %c0_17] : memref<64x128xbf16, #tpu.memory_space<vmem>>, vector<64x128xbf16>
    %cst_18 = arith.constant dense<0.000000e+00> : vector<8x128xf32>
    %22 = tpu.matmul %20, %21, %cst_18 {dimension_numbers = #tpu.dot_dimension_numbers<[1], [0], [0], [1], [0, 0, 1, 1], [], []>} : vector<8x64xbf16>, vector<64x128xbf16>, vector<8x128xf32> -> vector<8x128xf32>
    %c0_19 = arith.constant 0 : index
    %c0_20 = arith.constant 0 : index
    %23 = vector.load %arg7[%c0_19, %c0_20] : memref<8x128xf32, #tpu.memory_space<vmem>>, vector<8x128xf32>
    tpu.vector_store %arg7[%c0_19, %c0_20], %22 {strides = array<i32>} : memref<8x128xf32, #tpu.memory_space<vmem>>, vector<8x128xf32>,
    return
  }
  func.func @transform_0(%arg0: i32) -> (i32, i32) {
    %c0_i32 = arith.constant 0 : i32
    %c0_i32_0 = arith.constant 0 : i32
    return %arg0, %c0_i32 : i32, i32
  }
  func.func @transform_1(%arg0: i32) -> (i32, i32) {
    %c0_i32 = arith.constant 0 : i32
    %c0_i32_0 = arith.constant 0 : i32
    %c0_i32_1 = arith.constant 0 : i32
    return %c0_i32, %c0_i32_0 : i32, i32
  }
  func.func @transform_2(%arg0: i32) -> (i32, i32) {
    %c0_i32 = arith.constant 0 : i32
    %c0_i32_0 = arith.constant 0 : i32
    %c0_i32_1 = arith.constant 0 : i32
    return %c0_i32, %c0_i32_0 : i32, i32
  }
  func.func @transform_3(%arg0: i32) -> (i32, i32) {
    %c0_i32 = arith.constant 0 : i32
    %c0_i32_0 = arith.constant 0 : i32
    %c0_i32_1 = arith.constant 0 : i32
    return %c0_i32, %c0_i32_0 : i32, i32
  }
  func.func @transform_4(%arg0: i32) -> (i32, i32) {
    %c0_i32 = arith.constant 0 : i32
    %c0_i32_0 = arith.constant 0 : i32
    %c0_i32_1 = arith.constant 0 : i32
    return %c0_i32, %c0_i32_0 : i32, i32
  }
  func.func @transform_5(%arg0: i32) -> (i32, i32) {
    %c0_i32 = arith.constant 0 : i32
    %c0_i32_0 = arith.constant 0 : i32
    %c0_i32_1 = arith.constant 0 : i32
    return %c0_i32, %c0_i32_0 : i32, i32
  }
  func.func @transform_6(%arg0: i32) -> (i32, i32) {
    %c0_i32 = arith.constant 0 : i32
    %c0_i32_0 = arith.constant 0 : i32
    return %arg0, %c0_i32 : i32, i32
  }
}

</mosaic_0001>

<llo_original>
// kernel: tpu_custom_call.1
$region0: #{tpu_custom_call.1}
  #allocation0 [shape = 'u32[]', space=smem, size = 0x4, offset = 0x4, fixed_abs, tag = 'smem constant byte address 0x4 - core index']
  #allocation1 [shape = 'u32[72,128]{1,0:T(1,128)}', space=vmem, size = 0x9000, scoped, tag = 'internal scratch']
  %s0 = inlined_call_operand.vmem [shape: bf16[8,784], index: 0, kind: input, shape index: {}]
  %s1 = inlined_call_operand.vmem [shape: bf16[784,64], index: 1, kind: input, shape index: {}]
  %s2 = inlined_call_operand.vmem [shape: bf16[64,128], index: 2, kind: input, shape index: {}]
  %s3 = inlined_call_operand.vmem [shape: bf16[128,256], index: 3, kind: input, shape index: {}]
  %s4 = inlined_call_operand.vmem [shape: bf16[256,64], index: 4, kind: input, shape index: {}]
  %s5 = inlined_call_operand.vmem [shape: bf16[64,128], index: 5, kind: input, shape index: {}]
  %s6 = inlined_call_operand.hbm [shape: f32[8,128], index: 6, kind: output, shape index: {}]
  %s7 = sld [smem:[#allocation0]]
  $region34: #{tpu_custom_call.1} parent=0
    _
  %s9 = ssub.s32 1, %s7
  %s10 = scalar_select 0, %s9, %s7
  $region1: #{tpu_custom_call.1} parent=0
    #allocation2 [shape = 'u8[4096]{0}', space=vmem, size = 0x1000, scoped, tag = 'output window, operand 0, single buffered']
    #allocation3 [shape = 's32[1]{0}', space=sflag, size = 0x4, scoped, tag = 'scoped memory for tpu_custom_call.1']
    %11 = vsyncpa [#allocation3], 0
    // Predicated region
    $region2: #{tpu_custom_call.1} parent=1 // pred_check
      _
    $region3: #{tpu_custom_call.1} parent=1 // pred_check_branch
      %13 = sbr.rel (0) target = $region5
    $region4: #{tpu_custom_call.1} parent=1 // pred_region
      _
    $region5: #{tpu_custom_call.1} parent=1 // pred_fallthru
      _
    // Predicated region
    $region6: #{tpu_custom_call.1} parent=1 // pred_check
      _
    $region7: #{tpu_custom_call.1} parent=1 // pred_check_branch
      %15 = sbr.rel (0) target = $region9
    $region8: #{tpu_custom_call.1} parent=1 // pred_region
      _
    $region9: #{tpu_custom_call.1} parent=1 // pred_fallthru
      _
    // Predicated region
    $region10: #{tpu_custom_call.1} parent=1 // pred_check
      _
    $region11: #{tpu_custom_call.1} parent=1 // pred_check_branch
      %17 = sbr.rel (0) target = $region13
    $region12: #{tpu_custom_call.1} parent=1 // pred_region
      _
    $region13: #{tpu_custom_call.1} parent=1 // pred_fallthru
      _
    // Predicated region
    $region14: #{tpu_custom_call.1} parent=1 // pred_check
      _
    $region15: #{tpu_custom_call.1} parent=1 // pred_check_branch
      %19 = sbr.rel (0) target = $region17
    $region16: #{tpu_custom_call.1} parent=1 // pred_region
      _
    $region17: #{tpu_custom_call.1} parent=1 // pred_fallthru
      _
    // Predicated region
    $region18: #{tpu_custom_call.1} parent=1 // pred_check
      _
    $region19: #{tpu_custom_call.1} parent=1 // pred_check_branch
      %21 = sbr.rel (0) target = $region21
    $region20: #{tpu_custom_call.1} parent=1 // pred_region
      _
    $region21: #{tpu_custom_call.1} parent=1 // pred_fallthru
      _
    // Predicated region
    $region22: #{tpu_custom_call.1} parent=1 // pred_check
      _
    $region23: #{tpu_custom_call.1} parent=1 // pred_check_branch
      %23 = sbr.rel (0) target = $region25
    $region24: #{tpu_custom_call.1} parent=1 // pred_region
      _
    $region25: #{tpu_custom_call.1} parent=1 // pred_fallthru
      _
    %v25 = vld [vmem:[%s0] sm:$0xff]
    %v26 = vld [vmem:[%s0 + $0x8] sm:$0xff]
    %v27 = vld [vmem:[%s0 + $0x10] sm:$0xff]
    %v28 = vld [vmem:[%s0 + $0x18] sm:$0xf]
    %v29 = vld [vmem:[%s1] sm:$0xf]
    %v30 = vld [vmem:[%s1 + $0x4] sm:$0xf]
    %v31 = vld [vmem:[%s1 + $0x8] sm:$0xf]
    %v32 = vld [vmem:[%s1 + $0xc] sm:$0xf]
    %v33 = vld [vmem:[%s1 + $0x10] sm:$0xf]
    %v34 = vld [vmem:[%s1 + $0x14] sm:$0xf]
    %v35 = vld [vmem:[%s1 + $0x18] sm:$0xf]
    %v36 = vld [vmem:[%s1 + $0x1c] sm:$0xf]
    %v37 = vld [vmem:[%s1 + $0x20] sm:$0xf]
    %v38 = vld [vmem:[%s1 + $0x24] sm:$0xf]
    %v39 = vld [vmem:[%s1 + $0x28] sm:$0xf]
    %v40 = vld [vmem:[%s1 + $0x2c] sm:$0xf]
    %v41 = vld [vmem:[%s1 + $0x30] sm:$0xf]
    %v42 = vld [vmem:[%s1 + $0x34] sm:$0xf]
    %v43 = vld [vmem:[%s1 + $0x38] sm:$0xf]
    %v44 = vld [vmem:[%s1 + $0x3c] sm:$0xf]
    %v45 = vld [vmem:[%s1 + $0x40] sm:$0xf]
    %v46 = vld [vmem:[%s1 + $0x44] sm:$0xf]
    %v47 = vld [vmem:[%s1 + $0x48] sm:$0xf]
    %v48 = vld [vmem:[%s1 + $0x4c] sm:$0xf]
    %v49 = vld [vmem:[%s1 + $0x50] sm:$0xf]
    %v50 = vld [vmem:[%s1 + $0x54] sm:$0xf]
    %v51 = vld [vmem:[%s1 + $0x58] sm:$0xf]
    %v52 = vld [vmem:[%s1 + $0x5c] sm:$0xf]
    %v53 = vld [vmem:[%s1 + $0x60] sm:$0xf]
    %v54 = vld [vmem:[%s1 + $0x64] sm:$0xf]
    %v55 = vld [vmem:[%s1 + $0x68] sm:$0xf]
    %v56 = vld [vmem:[%s1 + $0x6c] sm:$0xf]
    %v57 = vld [vmem:[%s1 + $0x70] sm:$0xf]
    %v58 = vld [vmem:[%s1 + $0x74] sm:$0xf]
    %v59 = vld [vmem:[%s1 + $0x78] sm:$0xf]
    %v60 = vld [vmem:[%s1 + $0x7c] sm:$0xf]
    %v61 = vld [vmem:[%s1 + $0x80] sm:$0xf]
    %v62 = vld [vmem:[%s1 + $0x84] sm:$0xf]
    %v63 = vld [vmem:[%s1 + $0x88] sm:$0xf]
    %v64 = vld [vmem:[%s1 + $0x8c] sm:$0xf]
    %v65 = vld [vmem:[%s1 + $0x90] sm:$0xf]
    %v66 = vld [vmem:[%s1 + $0x94] sm:$0xf]
    %v67 = vld [vmem:[%s1 + $0x98] sm:$0xf]
    %v68 = vld [vmem:[%s1 + $0x9c] sm:$0xf]
    %v69 = vld [vmem:[%s1 + $0xa0] sm:$0xf]
    %v70 = vld [vmem:[%s1 + $0xa4] sm:$0xf]
    %v71 = vld [vmem:[%s1 + $0xa8] sm:$0xf]
    %v72 = vld [vmem:[%s1 + $0xac] sm:$0xf]
    %v73 = vld [vmem:[%s1 + $0xb0] sm:$0xf]
    %v74 = vld [vmem:[%s1 + $0xb4] sm:$0xf]
    %v75 = vld [vmem:[%s1 + $0xb8] sm:$0xf]
    %v76 = vld [vmem:[%s1 + $0xbc] sm:$0xf]
    %v77 = vld [vmem:[%s1 + $0xc0] sm:$0xf]
    %v78 = vld [vmem:[%s1 + $0xc4] sm:$0xf]
    %v79 = vld [vmem:[%s1 + $0xc8] sm:$0xf]
    %v80 = vld [vmem:[%s1 + $0xcc] sm:$0xf]
    %v81 = vld [vmem:[%s1 + $0xd0] sm:$0xf]
    %v82 = vld [vmem:[%s1 + $0xd4] sm:$0xf]
    %v83 = vld [vmem:[%s1 + $0xd8] sm:$0xf]
    %v84 = vld [vmem:[%s1 + $0xdc] sm:$0xf]
    %v85 = vld [vmem:[%s1 + $0xe0] sm:$0xf]
    %v86 = vld [vmem:[%s1 + $0xe4] sm:$0xf]
    %v87 = vld [vmem:[%s1 + $0xe8] sm:$0xf]
    %v88 = vld [vmem:[%s1 + $0xec] sm:$0xf]
    %v89 = vld [vmem:[%s1 + $0xf0] sm:$0xf]
    %v90 = vld [vmem:[%s1 + $0xf4] sm:$0xf]
    %v91 = vld [vmem:[%s1 + $0xf8] sm:$0xf]
    %v92 = vld [vmem:[%s1 + $0xfc] sm:$0xf]
    %v93 = vld [vmem:[%s1 + $0x100] sm:$0xf]
    %v94 = vld [vmem:[%s1 + $0x104] sm:$0xf]
    %v95 = vld [vmem:[%s1 + $0x108] sm:$0xf]
    %v96 = vld [vmem:[%s1 + $0x10c] sm:$0xf]
    %v97 = vld [vmem:[%s1 + $0x110] sm:$0xf]
    %v98 = vld [vmem:[%s1 + $0x114] sm:$0xf]
    %v99 = vld [vmem:[%s1 + $0x118] sm:$0xf]
    %v100 = vld [vmem:[%s1 + $0x11c] sm:$0xf]
    %v101 = vld [vmem:[%s1 + $0x120] sm:$0xf]
    %v102 = vld [vmem:[%s1 + $0x124] sm:$0xf]
    %v103 = vld [vmem:[%s1 + $0x128] sm:$0xf]
    %v104 = vld [vmem:[%s1 + $0x12c] sm:$0xf]
    %v105 = vld [vmem:[%s1 + $0x130] sm:$0xf]
    %v106 = vld [vmem:[%s1 + $0x134] sm:$0xf]
    %v107 = vld [vmem:[%s1 + $0x138] sm:$0xf]
    %v108 = vld [vmem:[%s1 + $0x13c] sm:$0xf]
    %v109 = vld [vmem:[%s1 + $0x140] sm:$0xf]
    %v110 = vld [vmem:[%s1 + $0x144] sm:$0xf]
    %v111 = vld [vmem:[%s1 + $0x148] sm:$0xf]
    %v112 = vld [vmem:[%s1 + $0x14c] sm:$0xf]
    %v113 = vld [vmem:[%s1 + $0x150] sm:$0xf]
    %v114 = vld [vmem:[%s1 + $0x154] sm:$0xf]
    %v115 = vld [vmem:[%s1 + $0x158] sm:$0xf]
    %v116 = vld [vmem:[%s1 + $0x15c] sm:$0xf]
    %v117 = vld [vmem:[%s1 + $0x160] sm:$0xf]
    %v118 = vld [vmem:[%s1 + $0x164] sm:$0xf]
    %v119 = vld [vmem:[%s1 + $0x168] sm:$0xf]
    %v120 = vld [vmem:[%s1 + $0x16c] sm:$0xf]
    %v121 = vld [vmem:[%s1 + $0x170] sm:$0xf]
    %v122 = vld [vmem:[%s1 + $0x174] sm:$0xf]
    %v123 = vld [vmem:[%s1 + $0x178] sm:$0xf]
    %v124 = vld [vmem:[%s1 + $0x17c] sm:$0xf]
    %v125 = vld [vmem:[%s1 + $0x180] sm:$0xf]
    %v126 = vld [vmem:[%s1 + $0x184] sm:$0xf]
    %v131 = vunpack.c.l.b16 %v25
    %v132 = vunpack.c.h.b16 %v25
    %v133 = vunpack.c.l.b16 %v26
    %v134 = vunpack.c.h.b16 %v26
    %v135 = vunpack.c.l.b16 %v27
    %v136 = vunpack.c.h.b16 %v27
    %v137 = vunpack.c.l.b16 %v28
    %v138 = vpack.c.b16 %v131, %v131
    %v139 = vpack.c.b16 %v132, %v132
    %v140 = vpack.c.b16 %v133, %v133
    %v141 = vpack.c.b16 %v134, %v134
    %v142 = vpack.c.b16 %v135, %v135
    %v143 = vpack.c.b16 %v136, %v136
    %v144 = vpack.c.b16 %v137, %v137
    %v249 = vunpack.c.l.b16 %v29
    %v250 = vunpack.c.l.b16 %v30
    %v251 = vunpack.c.l.b16 %v31
    %v252 = vunpack.c.l.b16 %v32
    %v253 = vunpack.c.l.b16 %v33
    %v254 = vunpack.c.l.b16 %v34
    %v255 = vunpack.c.l.b16 %v35
    %v256 = vunpack.c.l.b16 %v36
    %v257 = vunpack.c.l.b16 %v37
    %v258 = vunpack.c.l.b16 %v38
    %v259 = vunpack.c.l.b16 %v39
    %v260 = vunpack.c.l.b16 %v40
    %v261 = vunpack.c.l.b16 %v41
    %v262 = vunpack.c.l.b16 %v42
    %v263 = vunpack.c.l.b16 %v43
    %v264 = vunpack.c.l.b16 %v44
    %v265 = vunpack.c.l.b16 %v45
    %v266 = vunpack.c.l.b16 %v46
    %v267 = vunpack.c.l.b16 %v47
    %v268 = vunpack.c.l.b16 %v48
    %v269 = vunpack.c.l.b16 %v49
    %v270 = vunpack.c.l.b16 %v50
    %v271 = vunpack.c.l.b16 %v51
    %v272 = vunpack.c.l.b16 %v52
    %v273 = vunpack.c.l.b16 %v53
    %v274 = vunpack.c.l.b16 %v54
    %v275 = vunpack.c.l.b16 %v55
    %v276 = vunpack.c.l.b16 %v56
    %v277 = vunpack.c.l.b16 %v57
    %v278 = vunpack.c.l.b16 %v58
    %v279 = vunpack.c.l.b16 %v59
    %v280 = vunpack.c.l.b16 %v60
    %v281 = vunpack.c.l.b16 %v61
    %v282 = vunpack.c.l.b16 %v62
    %v283 = vunpack.c.l.b16 %v63
    %v284 = vunpack.c.l.b16 %v64
    %v285 = vunpack.c.l.b16 %v65
    %v286 = vunpack.c.l.b16 %v66
    %v287 = vunpack.c.l.b16 %v67
    %v288 = vunpack.c.l.b16 %v68
    %v289 = vunpack.c.l.b16 %v69
    %v290 = vunpack.c.l.b16 %v70
    %v291 = vunpack.c.l.b16 %v71
    %v292 = vunpack.c.l.b16 %v72
    %v293 = vunpack.c.l.b16 %v73
    %v294 = vunpack.c.l.b16 %v74
    %v295 = vunpack.c.l.b16 %v75
    %v296 = vunpack.c.l.b16 %v76
    %v297 = vunpack.c.l.b16 %v77
    %v298 = vunpack.c.l.b16 %v78
    %v299 = vunpack.c.l.b16 %v79
    %v300 = vunpack.c.l.b16 %v80
    %v301 = vunpack.c.l.b16 %v81
    %v302 = vunpack.c.l.b16 %v82
    %v303 = vunpack.c.l.b16 %v83
    %v304 = vunpack.c.l.b16 %v84
    %v305 = vunpack.c.l.b16 %v85
    %v306 = vunpack.c.l.b16 %v86
    %v307 = vunpack.c.l.b16 %v87
    %v308 = vunpack.c.l.b16 %v88
    %v309 = vunpack.c.l.b16 %v89
    %v310 = vunpack.c.l.b16 %v90
    %v311 = vunpack.c.l.b16 %v91
    %v312 = vunpack.c.l.b16 %v92
    %v313 = vunpack.c.l.b16 %v93
    %v314 = vunpack.c.l.b16 %v94
    %v315 = vunpack.c.l.b16 %v95
    %v316 = vunpack.c.l.b16 %v96
    %v317 = vunpack.c.l.b16 %v97
    %v318 = vunpack.c.l.b16 %v98
    %v319 = vunpack.c.l.b16 %v99
    %v320 = vunpack.c.l.b16 %v100
    %v321 = vunpack.c.l.b16 %v101
    %v322 = vunpack.c.l.b16 %v102
    %v323 = vunpack.c.l.b16 %v103
    %v324 = vunpack.c.l.b16 %v104
    %v325 = vunpack.c.l.b16 %v105
    %v326 = vunpack.c.l.b16 %v106
    %v327 = vunpack.c.l.b16 %v107
    %v328 = vunpack.c.l.b16 %v108
    %v329 = vunpack.c.l.b16 %v109
    %v330 = vunpack.c.l.b16 %v110
    %v331 = vunpack.c.l.b16 %v111
    %v332 = vunpack.c.l.b16 %v112
    %v333 = vunpack.c.l.b16 %v113
    %v334 = vunpack.c.l.b16 %v114
    %v335 = vunpack.c.l.b16 %v115
    %v336 = vunpack.c.l.b16 %v116
    %v337 = vunpack.c.l.b16 %v117
    %v338 = vunpack.c.l.b16 %v118
    %v339 = vunpack.c.l.b16 %v119
    %v340 = vunpack.c.l.b16 %v120
    %v341 = vunpack.c.l.b16 %v121
    %v342 = vunpack.c.l.b16 %v122
    %v343 = vunpack.c.l.b16 %v123
    %v344 = vunpack.c.l.b16 %v124
    %v345 = vunpack.c.l.b16 %v125
    %v346 = vunpack.c.l.b16 %v126
    %v347 = vpack.c.b16 %v250, %v249
    %v348 = vpack.c.b16 %v252, %v251
    %v349 = vpack.c.b16 %v254, %v253
    %v350 = vpack.c.b16 %v256, %v255
    %v351 = vpack.c.b16 %v258, %v257
    %v352 = vpack.c.b16 %v260, %v259
    %v353 = vpack.c.b16 %v262, %v261
    %v354 = vpack.c.b16 %v264, %v263
    %v355 = vpack.c.b16 %v266, %v265
    %v356 = vpack.c.b16 %v268, %v267
    %v357 = vpack.c.b16 %v270, %v269
    %v358 = vpack.c.b16 %v272, %v271
    %v359 = vpack.c.b16 %v274, %v273
    %v360 = vpack.c.b16 %v276, %v275
    %v361 = vpack.c.b16 %v278, %v277
    %v362 = vpack.c.b16 %v280, %v279
    %v363 = vpack.c.b16 %v282, %v281
    %v364 = vpack.c.b16 %v284, %v283
    %v365 = vpack.c.b16 %v286, %v285
    %v366 = vpack.c.b16 %v288, %v287
    %v367 = vpack.c.b16 %v290, %v289
    %v368 = vpack.c.b16 %v292, %v291
    %v369 = vpack.c.b16 %v294, %v293
    %v370 = vpack.c.b16 %v296, %v295
    %v371 = vpack.c.b16 %v298, %v297
    %v372 = vpack.c.b16 %v300, %v299
    %v373 = vpack.c.b16 %v302, %v301
    %v374 = vpack.c.b16 %v304, %v303
    %v375 = vpack.c.b16 %v306, %v305
    %v376 = vpack.c.b16 %v308, %v307
    %v377 = vpack.c.b16 %v310, %v309
    %v378 = vpack.c.b16 %v312, %v311
    %v379 = vpack.c.b16 %v314, %v313
    %v380 = vpack.c.b16 %v316, %v315
    %v381 = vpack.c.b16 %v318, %v317
    %v382 = vpack.c.b16 %v320, %v319
    %v383 = vpack.c.b16 %v322, %v321
    %v384 = vpack.c.b16 %v324, %v323
    %v385 = vpack.c.b16 %v326, %v325
    %v386 = vpack.c.b16 %v328, %v327
    %v387 = vpack.c.b16 %v330, %v329
    %v388 = vpack.c.b16 %v332, %v331
    %v389 = vpack.c.b16 %v334, %v333
    %v390 = vpack.c.b16 %v336, %v335
    %v391 = vpack.c.b16 %v338, %v337
    %v392 = vpack.c.b16 %v340, %v339
    %v393 = vpack.c.b16 %v342, %v341
    %v394 = vpack.c.b16 %v344, %v343
    %v395 = vpack.c.b16 %v346, %v345
    %vm445 = vcmask 130048
    %v447 = vsel %vm445, %v144, 0
    %449 = vmatpush.bf16.msra.mxu0 %v354
    %450 = vmatpush.bf16.msra.mxu0 %v353
    %451 = vmatpush.bf16.msra.mxu0 %v352
    %452 = vmatpush.bf16.msra.mxu0 %v351
    %453 = vmatpush.bf16.msra.mxu0 %v350
    %454 = vmatpush.bf16.msra.mxu0 %v349
    %455 = vmatpush.bf16.msra.mxu0 %v348
    %456 = vmatpush.bf16.msra.mxu0 %v347
    %457 = vmatmul.bf16.gmra.mxu0 %v138
    %v458 = vpop.f32.mrf.mxu0
    %v459 = vadd.f32 0.0, %v458
    %v460 = vpop.f32.mrf.mxu0
    %461 = vdwg.mxu0
    %462 = vmatpush.bf16.msra.mxu0 %v362
    %463 = vmatpush.bf16.msra.mxu0 %v361
    %464 = vmatpush.bf16.msra.mxu0 %v360
    %465 = vmatpush.bf16.msra.mxu0 %v359
    %466 = vmatpush.bf16.msra.mxu0 %v358
    %467 = vmatpush.bf16.msra.mxu0 %v357
    %468 = vmatpush.bf16.msra.mxu0 %v356
    %469 = vmatpush.bf16.msra.mxu0 %v355
    %470 = vmatmul.bf16.gmra.mxu0 %v139
    %v471 = vpop.f32.mrf.mxu0
    %v472 = vadd.f32 %v459, %v471
    %v473 = vpop.f32.mrf.mxu0
    %474 = vdwg.mxu0
    %475 = vmatpush.bf16.msra.mxu0 %v370
    %476 = vmatpush.bf16.msra.mxu0 %v369
    %477 = vmatpush.bf16.msra.mxu0 %v368
    %478 = vmatpush.bf16.msra.mxu0 %v367
    %479 = vmatpush.bf16.msra.mxu0 %v366
    %480 = vmatpush.bf16.msra.mxu0 %v365
    %481 = vmatpush.bf16.msra.mxu0 %v364
    %482 = vmatpush.bf16.msra.mxu0 %v363
    %483 = vmatmul.bf16.gmra.mxu0 %v140
    %v484 = vpop.f32.mrf.mxu0
    %v485 = vadd.f32 %v472, %v484
    %v486 = vpop.f32.mrf.mxu0
    %487 = vdwg.mxu0
    %488 = vmatpush.bf16.msra.mxu0 %v378
    %489 = vmatpush.bf16.msra.mxu0 %v377
    %490 = vmatpush.bf16.msra.mxu0 %v376
    %491 = vmatpush.bf16.msra.mxu0 %v375
    %492 = vmatpush.bf16.msra.mxu0 %v374
    %493 = vmatpush.bf16.msra.mxu0 %v373
    %494 = vmatpush.bf16.msra.mxu0 %v372
    %495 = vmatpush.bf16.msra.mxu0 %v371
    %496 = vmatmul.bf16.gmra.mxu0 %v141
    %v497 = vpop.f32.mrf.mxu0
    %v498 = vadd.f32 %v485, %v497
    %v499 = vpop.f32.mrf.mxu0
    %500 = vdwg.mxu0
    %501 = vmatpush.bf16.msra.mxu0 %v386
    %502 = vmatpush.bf16.msra.mxu0 %v385
    %503 = vmatpush.bf16.msra.mxu0 %v384
    %504 = vmatpush.bf16.msra.mxu0 %v383
    %505 = vmatpush.bf16.msra.mxu0 %v382
    %506 = vmatpush.bf16.msra.mxu0 %v381
    %507 = vmatpush.bf16.msra.mxu0 %v380
    %508 = vmatpush.bf16.msra.mxu0 %v379
    %509 = vmatmul.bf16.gmra.mxu0 %v142
    %v510 = vpop.f32.mrf.mxu0
    %v511 = vadd.f32 %v498, %v510
    %v512 = vpop.f32.mrf.mxu0
    %513 = vdwg.mxu0
    %514 = vmatpush.bf16.msra.mxu0 %v394
    %515 = vmatpush.bf16.msra.mxu0 %v393
    %516 = vmatpush.bf16.msra.mxu0 %v392
    %517 = vmatpush.bf16.msra.mxu0 %v391
    %518 = vmatpush.bf16.msra.mxu0 %v390
    %519 = vmatpush.bf16.msra.mxu0 %v389
    %520 = vmatpush.bf16.msra.mxu0 %v388
    %521 = vmatpush.bf16.msra.mxu0 %v387
    %522 = vmatmul.bf16.gmra.mxu0 %v143
    %v523 = vpop.f32.mrf.mxu0
    %v524 = vadd.f32 %v511, %v523
    %v525 = vpop.f32.mrf.mxu0
    %526 = vdwg.mxu0
    %527 = vmatpush.bf16.msra.mxu0 0
    %528 = vmatpush.bf16.msra.mxu0 0
    %529 = vmatpush.bf16.msra.mxu0 0
    %530 = vmatpush.bf16.msra.mxu0 0
    %531 = vmatpush.bf16.msra.mxu0 0
    %532 = vmatpush.bf16.msra.mxu0 0
    %533 = vmatpush.bf16.msra.mxu0 0
    %534 = vmatpush.bf16.msra.mxu0 %v395
    %535 = vmatmul.bf16.gmra.mxu0 %v447
    %v536 = vpop.f32.mrf.mxu0
    %v537 = vadd.f32 %v524, %v536
    %v538 = vpop.f32.mrf.mxu0
    %539 = vdwg.mxu0
    %v540 = vmax.f32 %v537, 0.0
    %v541 = vpack.c.bf16 %v540, %v540
    %v542 = vld [vmem:[%s2] sm:$0xf]
    %v543 = vld [vmem:[%s2 + $0x4] sm:$0xf]
    %v544 = vld [vmem:[%s2 + $0x8] sm:$0xf]
    %v545 = vld [vmem:[%s2 + $0xc] sm:$0xf]
    %v546 = vld [vmem:[%s2 + $0x10] sm:$0xf]
    %v547 = vld [vmem:[%s2 + $0x14] sm:$0xf]
    %v548 = vld [vmem:[%s2 + $0x18] sm:$0xf]
    %v549 = vld [vmem:[%s2 + $0x1c] sm:$0xf]
    %v558 = vunpack.c.l.b16 %v542
    %v559 = vunpack.c.l.b16 %v543
    %v560 = vunpack.c.l.b16 %v544
    %v561 = vunpack.c.l.b16 %v545
    %v562 = vunpack.c.l.b16 %v546
    %v563 = vunpack.c.l.b16 %v547
    %v564 = vunpack.c.l.b16 %v548
    %v565 = vunpack.c.l.b16 %v549
    %v566 = vpack.c.b16 %v559, %v558
    %v567 = vpack.c.b16 %v561, %v560
    %v568 = vpack.c.b16 %v563, %v562
    %v569 = vpack.c.b16 %v565, %v564
    %vm574 = vcmask 523264
    %v576 = vsel %vm574, %v541, 0
    %578 = vmatpush.bf16.msra.mxu0 0
    %579 = vmatpush.bf16.msra.mxu0 0
    %580 = vmatpush.bf16.msra.mxu0 0
    %581 = vmatpush.bf16.msra.mxu0 0
    %582 = vmatpush.bf16.msra.mxu0 %v569
    %583 = vmatpush.bf16.msra.mxu0 %v568
    %584 = vmatpush.bf16.msra.mxu0 %v567
    %585 = vmatpush.bf16.msra.mxu0 %v566
    %586 = vmatmul.bf16.gmra.mxu0 %v576
    %v587 = vpop.f32.mrf.mxu0
    %v588 = vadd.f32 0.0, %v587
    %v589 = vpop.f32.mrf.mxu0
    %590 = vdwg.mxu0
    %v591 = vmax.f32 %v588, 0.0
    %v592 = vpack.c.bf16 %v591, %v591
    %v593 = vld [vmem:[%s3] sm:$0xff]
    %v594 = vld [vmem:[%s3 + $0x8] sm:$0xff]
    %v595 = vld [vmem:[%s3 + $0x10] sm:$0xff]
    %v596 = vld [vmem:[%s3 + $0x18] sm:$0xff]
    %v597 = vld [vmem:[%s3 + $0x20] sm:$0xff]
    %v598 = vld [vmem:[%s3 + $0x28] sm:$0xff]
    %v599 = vld [vmem:[%s3 + $0x30] sm:$0xff]
    %v600 = vld [vmem:[%s3 + $0x38] sm:$0xff]
    %v601 = vld [vmem:[%s3 + $0x40] sm:$0xff]
    %v602 = vld [vmem:[%s3 + $0x48] sm:$0xff]
    %v603 = vld [vmem:[%s3 + $0x50] sm:$0xff]
    %v604 = vld [vmem:[%s3 + $0x58] sm:$0xff]
    %v605 = vld [vmem:[%s3 + $0x60] sm:$0xff]
    %v606 = vld [vmem:[%s3 + $0x68] sm:$0xff]
    %v607 = vld [vmem:[%s3 + $0x70] sm:$0xff]
    %v608 = vld [vmem:[%s3 + $0x78] sm:$0xff]
    %v625 = vunpack.c.l.b16 %v593
    %v626 = vunpack.c.h.b16 %v593
    %v627 = vunpack.c.l.b16 %v594
    %v628 = vunpack.c.h.b16 %v594
    %v629 = vunpack.c.l.b16 %v595
    %v630 = vunpack.c.h.b16 %v595
    %v631 = vunpack.c.l.b16 %v596
    %v632 = vunpack.c.h.b16 %v596
    %v633 = vunpack.c.l.b16 %v597
    %v634 = vunpack.c.h.b16 %v597
    %v635 = vunpack.c.l.b16 %v598
    %v636 = vunpack.c.h.b16 %v598
    %v637 = vunpack.c.l.b16 %v599
    %v638 = vunpack.c.h.b16 %v599
    %v639 = vunpack.c.l.b16 %v600
    %v640 = vunpack.c.h.b16 %v600
    %v641 = vunpack.c.l.b16 %v601
    %v642 = vunpack.c.h.b16 %v601
    %v643 = vunpack.c.l.b16 %v602
    %v644 = vunpack.c.h.b16 %v602
    %v645 = vunpack.c.l.b16 %v603
    %v646 = vunpack.c.h.b16 %v603
    %v647 = vunpack.c.l.b16 %v604
    %v648 = vunpack.c.h.b16 %v604
    %v649 = vunpack.c.l.b16 %v605
    %v650 = vunpack.c.h.b16 %v605
    %v651 = vunpack.c.l.b16 %v606
    %v652 = vunpack.c.h.b16 %v606
    %v653 = vunpack.c.l.b16 %v607
    %v654 = vunpack.c.h.b16 %v607
    %v655 = vunpack.c.l.b16 %v608
    %v656 = vunpack.c.h.b16 %v608
    %v657 = vpack.c.b16 %v627, %v625
    %v658 = vpack.c.b16 %v628, %v626
    %v659 = vpack.c.b16 %v631, %v629
    %v660 = vpack.c.b16 %v632, %v630
    %v661 = vpack.c.b16 %v635, %v633
    %v662 = vpack.c.b16 %v636, %v634
    %v663 = vpack.c.b16 %v639, %v637
    %v664 = vpack.c.b16 %v640, %v638
    %v665 = vpack.c.b16 %v643, %v641
    %v666 = vpack.c.b16 %v644, %v642
    %v667 = vpack.c.b16 %v647, %v645
    %v668 = vpack.c.b16 %v648, %v646
    %v669 = vpack.c.b16 %v651, %v649
    %v670 = vpack.c.b16 %v652, %v650
    %v671 = vpack.c.b16 %v655, %v653
    %v672 = vpack.c.b16 %v656, %v654
    %689 = vmatpush.bf16.msra.mxu0 %v671
    %690 = vmatpush.bf16.msra.mxu0 %v669
    %691 = vmatpush.bf16.msra.mxu0 %v667
    %692 = vmatpush.bf16.msra.mxu0 %v665
    %693 = vmatpush.bf16.msra.mxu0 %v663
    %694 = vmatpush.bf16.msra.mxu0 %v661
    %695 = vmatpush.bf16.msra.mxu0 %v659
    %696 = vmatpush.bf16.msra.mxu0 %v657
    %697 = vmatmul.bf16.gmra.mxu0 %v592
    %v698 = vpop.f32.mrf.mxu0
    %v699 = vadd.f32 0.0, %v698
    %v700 = vpop.f32.mrf.mxu0
    %701 = vdwg.mxu0
    %702 = vmatpush.bf16.msra.mxu0 %v672
    %703 = vmatpush.bf16.msra.mxu0 %v670
    %704 = vmatpush.bf16.msra.mxu0 %v668
    %705 = vmatpush.bf16.msra.mxu0 %v666
    %706 = vmatpush.bf16.msra.mxu0 %v664
    %707 = vmatpush.bf16.msra.mxu0 %v662
    %708 = vmatpush.bf16.msra.mxu0 %v660
    %709 = vmatpush.bf16.msra.mxu0 %v658
    %710 = vmatmul.bf16.gmra.mxu0 %v592
    %v711 = vpop.f32.mrf.mxu0
    %v712 = vadd.f32 0.0, %v711
    %v713 = vpop.f32.mrf.mxu0
    %714 = vdwg.mxu0
    %v715 = vmax.f32 %v699, 0.0
    %v716 = vmax.f32 %v712, 0.0
    %v717 = vpack.c.bf16 %v715, %v715
    %v718 = vpack.c.bf16 %v716, %v716
    %v719 = vld [vmem:[%s4] sm:$0xf]
    %v720 = vld [vmem:[%s4 + $0x4] sm:$0xf]
    %v721 = vld [vmem:[%s4 + $0x8] sm:$0xf]
    %v722 = vld [vmem:[%s4 + $0xc] sm:$0xf]
    %v723 = vld [vmem:[%s4 + $0x10] sm:$0xf]
    %v724 = vld [vmem:[%s4 + $0x14] sm:$0xf]
    %v725 = vld [vmem:[%s4 + $0x18] sm:$0xf]
    %v726 = vld [vmem:[%s4 + $0x1c] sm:$0xf]
    %v727 = vld [vmem:[%s4 + $0x20] sm:$0xf]
    %v728 = vld [vmem:[%s4 + $0x24] sm:$0xf]
    %v729 = vld [vmem:[%s4 + $0x28] sm:$0xf]
    %v730 = vld [vmem:[%s4 + $0x2c] sm:$0xf]
    %v731 = vld [vmem:[%s4 + $0x30] sm:$0xf]
    %v732 = vld [vmem:[%s4 + $0x34] sm:$0xf]
    %v733 = vld [vmem:[%s4 + $0x38] sm:$0xf]
    %v734 = vld [vmem:[%s4 + $0x3c] sm:$0xf]
    %v735 = vld [vmem:[%s4 + $0x40] sm:$0xf]
    %v736 = vld [vmem:[%s4 + $0x44] sm:$0xf]
    %v737 = vld [vmem:[%s4 + $0x48] sm:$0xf]
    %v738 = vld [vmem:[%s4 + $0x4c] sm:$0xf]
    %v739 = vld [vmem:[%s4 + $0x50] sm:$0xf]
    %v740 = vld [vmem:[%s4 + $0x54] sm:$0xf]
    %v741 = vld [vmem:[%s4 + $0x58] sm:$0xf]
    %v742 = vld [vmem:[%s4 + $0x5c] sm:$0xf]
    %v743 = vld [vmem:[%s4 + $0x60] sm:$0xf]
    %v744 = vld [vmem:[%s4 + $0x64] sm:$0xf]
    %v745 = vld [vmem:[%s4 + $0x68] sm:$0xf]
    %v746 = vld [vmem:[%s4 + $0x6c] sm:$0xf]
    %v747 = vld [vmem:[%s4 + $0x70] sm:$0xf]
    %v748 = vld [vmem:[%s4 + $0x74] sm:$0xf]
    %v749 = vld [vmem:[%s4 + $0x78] sm:$0xf]
    %v750 = vld [vmem:[%s4 + $0x7c] sm:$0xf]
    %v783 = vunpack.c.l.b16 %v719
    %v784 = vunpack.c.l.b16 %v720
    %v785 = vunpack.c.l.b16 %v721
    %v786 = vunpack.c.l.b16 %v722
    %v787 = vunpack.c.l.b16 %v723
    %v788 = vunpack.c.l.b16 %v724
    %v789 = vunpack.c.l.b16 %v725
    %v790 = vunpack.c.l.b16 %v726
    %v791 = vunpack.c.l.b16 %v727
    %v792 = vunpack.c.l.b16 %v728
    %v793 = vunpack.c.l.b16 %v729
    %v794 = vunpack.c.l.b16 %v730
    %v795 = vunpack.c.l.b16 %v731
    %v796 = vunpack.c.l.b16 %v732
    %v797 = vunpack.c.l.b16 %v733
    %v798 = vunpack.c.l.b16 %v734
    %v799 = vunpack.c.l.b16 %v735
    %v800 = vunpack.c.l.b16 %v736
    %v801 = vunpack.c.l.b16 %v737
    %v802 = vunpack.c.l.b16 %v738
    %v803 = vunpack.c.l.b16 %v739
    %v804 = vunpack.c.l.b16 %v740
    %v805 = vunpack.c.l.b16 %v741
    %v806 = vunpack.c.l.b16 %v742
    %v807 = vunpack.c.l.b16 %v743
    %v808 = vunpack.c.l.b16 %v744
    %v809 = vunpack.c.l.b16 %v745
    %v810 = vunpack.c.l.b16 %v746
    %v811 = vunpack.c.l.b16 %v747
    %v812 = vunpack.c.l.b16 %v748
    %v813 = vunpack.c.l.b16 %v749
    %v814 = vunpack.c.l.b16 %v750
    %v815 = vpack.c.b16 %v784, %v783
    %v816 = vpack.c.b16 %v786, %v785
    %v817 = vpack.c.b16 %v788, %v787
    %v818 = vpack.c.b16 %v790, %v789
    %v819 = vpack.c.b16 %v792, %v791
    %v820 = vpack.c.b16 %v794, %v793
    %v821 = vpack.c.b16 %v796, %v795
    %v822 = vpack.c.b16 %v798, %v797
    %v823 = vpack.c.b16 %v800, %v799
    %v824 = vpack.c.b16 %v802, %v801
    %v825 = vpack.c.b16 %v804, %v803
    %v826 = vpack.c.b16 %v806, %v805
    %v827 = vpack.c.b16 %v808, %v807
    %v828 = vpack.c.b16 %v810, %v809
    %v829 = vpack.c.b16 %v812, %v811
    %v830 = vpack.c.b16 %v814, %v813
    %847 = vmatpush.bf16.msra.mxu0 %v822
    %848 = vmatpush.bf16.msra.mxu0 %v821
    %849 = vmatpush.bf16.msra.mxu0 %v820
    %850 = vmatpush.bf16.msra.mxu0 %v819
    %851 = vmatpush.bf16.msra.mxu0 %v818
    %852 = vmatpush.bf16.msra.mxu0 %v817
    %853 = vmatpush.bf16.msra.mxu0 %v816
    %854 = vmatpush.bf16.msra.mxu0 %v815
    %855 = vmatmul.bf16.gmra.mxu0 %v717
    %v856 = vpop.f32.mrf.mxu0
    %v857 = vadd.f32 0.0, %v856
    %v858 = vpop.f32.mrf.mxu0
    %859 = vdwg.mxu0
    %860 = vmatpush.bf16.msra.mxu0 %v830
    %861 = vmatpush.bf16.msra.mxu0 %v829
    %862 = vmatpush.bf16.msra.mxu0 %v828
    %863 = vmatpush.bf16.msra.mxu0 %v827
    %864 = vmatpush.bf16.msra.mxu0 %v826
    %865 = vmatpush.bf16.msra.mxu0 %v825
    %866 = vmatpush.bf16.msra.mxu0 %v824
    %867 = vmatpush.bf16.msra.mxu0 %v823
    %868 = vmatmul.bf16.gmra.mxu0 %v718
    %v869 = vpop.f32.mrf.mxu0
    %v870 = vadd.f32 %v857, %v869
    %v871 = vpop.f32.mrf.mxu0
    %872 = vdwg.mxu0
    %v873 = vmax.f32 %v870, 0.0
    %v874 = vpack.c.bf16 %v873, %v873
    %v875 = vld [vmem:[%s5] sm:$0xf]
    %v876 = vld [vmem:[%s5 + $0x4] sm:$0xf]
    %v877 = vld [vmem:[%s5 + $0x8] sm:$0xf]
    %v878 = vld [vmem:[%s5 + $0xc] sm:$0xf]
    %v879 = vld [vmem:[%s5 + $0x10] sm:$0xf]
    %v880 = vld [vmem:[%s5 + $0x14] sm:$0xf]
    %v881 = vld [vmem:[%s5 + $0x18] sm:$0xf]
    %v882 = vld [vmem:[%s5 + $0x1c] sm:$0xf]
    %v891 = vunpack.c.l.b16 %v875
    %v892 = vunpack.c.l.b16 %v876
    %v893 = vunpack.c.l.b16 %v877
    %v894 = vunpack.c.l.b16 %v878
    %v895 = vunpack.c.l.b16 %v879
    %v896 = vunpack.c.l.b16 %v880
    %v897 = vunpack.c.l.b16 %v881
    %v898 = vunpack.c.l.b16 %v882
    %v899 = vpack.c.b16 %v892, %v891
    %v900 = vpack.c.b16 %v894, %v893
    %v901 = vpack.c.b16 %v896, %v895
    %v902 = vpack.c.b16 %v898, %v897
    %v908 = vsel %vm574, %v874, 0
    %910 = vmatpush.bf16.msra.mxu0 0
    %911 = vmatpush.bf16.msra.mxu0 0
    %912 = vmatpush.bf16.msra.mxu0 0
    %913 = vmatpush.bf16.msra.mxu0 0
    %914 = vmatpush.bf16.msra.mxu0 %v902
    %915 = vmatpush.bf16.msra.mxu0 %v901
    %916 = vmatpush.bf16.msra.mxu0 %v900
    %917 = vmatpush.bf16.msra.mxu0 %v899
    %918 = vmatmul.bf16.gmra.mxu0 %v908
    %v919 = vpop.f32.mrf.mxu0
    %v920 = vadd.f32 0.0, %v919
    %v921 = vpop.f32.mrf.mxu0
    %922 = vdwg.mxu0
    %923 = vst [vmem:[#allocation2] sm:$0xff] %v920
    // Predicated region
    $region26: #{tpu_custom_call.1} parent=1 // pred_check
      _
    $region27: #{tpu_custom_call.1} parent=1 // pred_check_branch
      %925 = sbr.rel (0) target = $region29
    $region28: #{tpu_custom_call.1} parent=1 // pred_region
      %927 = vsyncadd [#allocation3], 0
      %s929 = sshll.u32 [#allocation2], 4
      %s930 = int_to_ptr.vmem [resolvable:$true] %s929
      %s931 = sshll.u32 %s6, 4
      %s932 = int_to_ptr.hbm [resolvable:$true] %s931
      %934 = dma.vmem_to_hbm [thread:$0]  %s930, 128, %s932, [#allocation3]
    $region29: #{tpu_custom_call.1} parent=1 // pred_fallthru
      _
    // Predicated region
    $region30: #{tpu_custom_call.1} parent=1 // pred_check
      _
    $region31: #{tpu_custom_call.1} parent=1 // pred_check_branch
      %936 = sbr.rel (0) target = $region33
    $region32: #{tpu_custom_call.1} parent=1 // pred_region
      %938 = dma.done [#allocation3], 128
    $region33: #{tpu_custom_call.1} parent=1 // pred_fallthru
      _
    %939 = vsyncpa [#allocation3], 1

</llo_original>
